<compile_context>
chip_gen: v6e
topology: v6e:2x2x1
jax: 0.10.0
libtpu: 0.0.40
codegen_flags: <defaults>
</compile_context>

<pallas_src>
import jax
import jax.numpy as jnp
from jax.experimental import pallas as pl
from jax.experimental.pallas import tpu as pltpu

_LANES = 128
_TARGET_BLOCK_BYTES = 4 * 1024 * 1024     # 4 MiB per f32 input block
_VMEM_LIMIT_BYTES = 40 * 1024 * 1024      # < 64 MiB physical on v7x, safe on v5e/v6e
_MAX_COLS = 65536                         # beyond this the ragged path falls back


def _partials_for_device():
    """Per-core partial sums: >1 only on chips with multiple TensorCores."""
    try:
        kind = jax.devices()[0].device_kind.lower()
    except Exception:
        return 1
    if "7" in kind or "v4" in kind or "v5p" in kind:
        return 2
    return 1


def _make_sse_kernel(rows, cols, tile_rows, acc_rows, tiles_per_partial,
                     needs_mask, first_ragged_tile):
    """Sum-of-squared-errors kernel specialized for static tiling params."""
    groups = tile_rows // acc_rows  # tile_rows is a multiple of acc_rows

    def _fold(d2):
        # (tile_rows, cols) -> (acc_rows, cols): pure VPU vreg adds with
        # acc_rows/8 independent accumulation chains, hidden under the DMA.
        return jnp.sum(d2.reshape(groups, acc_rows, cols), axis=0)

    def kernel(x_ref, y_ref, out_ref, acc_ref):
        c = pl.program_id(0)   # partial-sum (core) index
        i = pl.program_id(1)   # tile index within this partial

        @pl.when(i == 0)
        def _init():
            acc_ref[...] = jnp.zeros_like(acc_ref)

        d = x_ref[...].astype(jnp.float32) - y_ref[...].astype(jnp.float32)
        d2 = d * d

        if needs_mask:
            t = c * tiles_per_partial + i

            # Fast path: interior tiles need no masking at all.
            @pl.when(t < first_ragged_tile)
            def _interior():
                acc_ref[...] += _fold(d2)

            # Ragged last tile and clamped overrun tiles: zero rows past the
            # logical end (select, so NaN/garbage-safe for OOB reads).
            @pl.when(t >= first_ragged_tile)
            def _ragged():
                row = t * tile_rows + jax.lax.broadcasted_iota(
                    jnp.int32, (tile_rows, cols), 0)
                acc_ref[...] += _fold(jnp.where(row < rows, d2, 0.0))
        else:
            acc_ref[...] += _fold(d2)

        # One cross-lane/sublane reduce + SMEM scalar store per partial.
        @pl.when(i == pl.num_programs(1) - 1)
        def _flush():
            out_ref[0, 0] = jnp.sum(acc_ref[...])

    return kernel


def mse_loss_sum(estimated_density_map, gt_map):
    """Equivalent of nn.MSELoss(size_average=False)(est, gt) -> scalar SSE."""
    assert estimated_density_map.shape == gt_map.shape

    x = estimated_density_map.reshape(-1)
    y = gt_map.reshape(-1)
    n = x.shape[0]

    if n == 0:
        return jnp.zeros((), jnp.float32)

    # Pick a lane (last) dim that makes the 2-D view a *free* reshape of the
    # contiguous flat data: 128 when possible, otherwise the original
    # trailing dim (full-extent last dim is always a legal block dim).
    if n % _LANES == 0:
        cols = _LANES
    elif estimated_density_map.ndim >= 1:
        cols = int(estimated_density_map.shape[-1])
    else:
        cols = 1
    rows = n // cols  # exact by construction

    cols_padded = ((cols + _LANES - 1) // _LANES) * _LANES
    max_tile_rows = (_TARGET_BLOCK_BYTES // (cols_padded * 4)) // 8 * 8

    if rows < 8 or cols > _MAX_COLS or max_tile_rows < 8:
        # Tiny or degenerate shapes: a kernel launch isn't worthwhile.
        d = x.astype(jnp.float32) - y.astype(jnp.float32)
        return jnp.sum(d * d)

    x2d = x.reshape(rows, cols)
    y2d = y.reshape(rows, cols)

    tile_rows = min(max_tile_rows, (rows // 8) * 8)
    num_tiles = pl.cdiv(rows, tile_rows)

    num_partials = _partials_for_device()
    if num_tiles < num_partials:
        num_partials = 1
    tiles_per_partial = pl.cdiv(num_tiles, num_partials)
    covered = num_partials * tiles_per_partial

    needs_mask = (rows % tile_rows != 0) or (covered != num_tiles)
    first_ragged_tile = rows // tile_rows

    acc_rows = 8
    for cand in (64, 32, 16):
        if tile_rows % cand == 0:
            acc_rows = cand
            break

    kernel = _make_sse_kernel(rows, cols, tile_rows, acc_rows,
                              tiles_per_partial, needs_mask,
                              first_ragged_tile)

    if covered != num_tiles:
        # Clamp overrun block indices; the in-kernel mask zeroes their data.
        def in_map(c, i):
            return (jnp.minimum(c * tiles_per_partial + i, num_tiles - 1), 0)
    else:
        def in_map(c, i):
            return (c * tiles_per_partial + i, 0)

    partials = pl.pallas_call(
        kernel,
        out_shape=jax.ShapeDtypeStruct((num_partials, 1), jnp.float32),
        grid_spec=pltpu.PrefetchScalarGridSpec(
            num_scalar_prefetch=0,
            grid=(num_partials, tiles_per_partial),
            in_specs=[
                pl.BlockSpec((tile_rows, cols), in_map),
                pl.BlockSpec((tile_rows, cols), in_map),
            ],
            out_specs=pl.BlockSpec(
                (1, 1), lambda c, i: (c, 0), memory_space=pltpu.SMEM
            ),
            scratch_shapes=[pltpu.VMEM((acc_rows, cols), jnp.float32)],
        ),
        compiler_params=pltpu.CompilerParams(
            dimension_semantics=("parallel", "arbitrary"),
            vmem_limit_bytes=_VMEM_LIMIT_BYTES,
        ),
    )(x2d, y2d)

    return jnp.sum(partials)


class Loss:
    """Parity with the PyTorch module: Loss()(est, gt) -> scalar SSE."""

    def __call__(self, estimated_density_map, gt_map):
        return mse_loss_sum(estimated_density_map, gt_map)


if __name__ == "__main__":
    key = jax.random.PRNGKey(0)
    k1, k2, k3, k4, k5, k6 = jax.random.split(key, 6)

    loss_fn = jax.jit(mse_loss_sum)

    # Case 1: small NCHW density maps (lane-aligned, single tile).
    est1 = jax.random.normal(k1, (2, 4, 16, 16), dtype=jnp.float32)
    gt1 = jax.random.normal(k2, (2, 4, 16, 16), dtype=jnp.float32)
    out1 = loss_fn(est1, gt1)
    jax.block_until_ready(out1)
    ref1 = jnp.sum((est1 - gt1) ** 2)
    assert jnp.allclose(out1, ref1, rtol=1e-5, atol=1e-3), (out1, ref1)

    # Case 2: ragged element count (not a multiple of 128) -> exercises the
    # copy-free (n // W, W) view plus in-kernel row masking.
    est2 = jax.random.normal(k3, (1, 3, 17, 23), dtype=jnp.float32)
    gt2 = jax.random.normal(k4, (1, 3, 17, 23), dtype=jnp.float32)
    out2 = loss_fn(est2, gt2)
    jax.block_until_ready(out2)
    ref2 = jnp.sum((est2 - gt2) ** 2)
    assert jnp.allclose(out2, ref2, rtol=1e-5, atol=1e-3), (out2, ref2)

    # Case 3: larger density map -> exercises 4 MiB (8192,128) blocks, the
    # multi-tile grid, the gated ragged-tile mask and the wide accumulator.
    est3 = jax.random.normal(k5, (1, 1, 1024, 1152), dtype=jnp.float32)
    gt3 = jax.random.normal(k6, (1, 1, 1024, 1152), dtype=jnp.float32)
    out3 = loss_fn(est3, gt3)
    jax.block_until_ready(out3)
    ref3 = jnp.sum((est3 - gt3) ** 2)
    assert jnp.allclose(out3, ref3, rtol=2e-4, atol=1e-1), (out3, ref3)

    print("KERNEL_OK")
</pallas_src>

<mosaic_0001>
module attributes {stable_mosaic.version = 11 : i64} {
  func.func @kernel(%arg0: i32, %arg1: i32, %arg2: memref<16x128xf32, #tpu.memory_space<vmem>>, %arg3: memref<16x128xf32, #tpu.memory_space<vmem>>, %arg4: memref<1x1xf32, #tpu.memory_space<smem>>, %arg5: memref<16x128xf32, #tpu.memory_space<vmem>>) attributes {dimension_semantics = [#tpu.dimension_semantics<parallel>, #tpu.dimension_semantics<arbitrary>], iteration_bounds = array<i64: 1, 1>, scalar_prefetch = 0 : i64, scratch_operands = 1 : i64, tpu.core_type = #tpu.core_type<tc>, window_params = [{transform_indices = @transform_0, window_bounds = array<i64: 16, 128>}, {transform_indices = @transform_1, window_bounds = array<i64: 16, 128>}, {transform_indices = @transform_2, window_bounds = array<i64: 1, 1>}]} {
    %c0_i32 = arith.constant 0 : i32
    %0 = arith.cmpi eq, %arg1, %c0_i32 : i32
    %1 = arith.extui %0 : i1 to i32
    %c0_i32_0 = arith.constant 0 : i32
    %2 = arith.cmpi ne, %1, %c0_i32_0 : i32
    scf.if %2 {
      %cst_10 = arith.constant 0.000000e+00 : f32
      %15 = vector.broadcast %cst_10 : f32 to vector<16x128xf32>
      %c0_11 = arith.constant 0 : index
      %c0_12 = arith.constant 0 : index
      %16 = vector.load %arg5[%c0_11, %c0_12] : memref<16x128xf32, #tpu.memory_space<vmem>>, vector<16x128xf32>
      tpu.vector_store %arg5[%c0_11, %c0_12], %15 {strides = array<i32>} : memref<16x128xf32, #tpu.memory_space<vmem>>, vector<16x128xf32>,
    } else {
    }
    %c0 = arith.constant 0 : index
    %c0_1 = arith.constant 0 : index
    %3 = vector.load %arg2[%c0, %c0_1] : memref<16x128xf32, #tpu.memory_space<vmem>>, vector<16x128xf32>
    %c0_2 = arith.constant 0 : index
    %c0_3 = arith.constant 0 : index
    %4 = vector.load %arg3[%c0_2, %c0_3] : memref<16x128xf32, #tpu.memory_space<vmem>>, vector<16x128xf32>
    %5 = arith.subf %3, %4 : vector<16x128xf32>
    %6 = arith.mulf %5, %5 : vector<16x128xf32>
    %c0_4 = arith.constant 0 : index
    %c0_5 = arith.constant 0 : index
    %7 = vector.load %arg5[%c0_4, %c0_5] : memref<16x128xf32, #tpu.memory_space<vmem>>, vector<16x128xf32>
    %8 = vector.shape_cast %6 : vector<16x128xf32> to vector<1x16x128xf32>
    %cst = arith.constant dense<0.000000e+00> : vector<16x128xf32>
    %9 = vector.multi_reduction <add>, %8, %cst [0] : vector<1x16x128xf32> to vector<16x128xf32>
    %10 = arith.addf %7, %9 : vector<16x128xf32>
    %c0_6 = arith.constant 0 : index
    %c0_7 = arith.constant 0 : index
    %11 = vector.load %arg5[%c0_6, %c0_7] : memref<16x128xf32, #tpu.memory_space<vmem>>, vector<16x128xf32>
    tpu.vector_store %arg5[%c0_6, %c0_7], %10 {strides = array<i32>} : memref<16x128xf32, #tpu.memory_space<vmem>>, vector<16x128xf32>,
    %c0_i32_8 = arith.constant 0 : i32
    %12 = arith.cmpi eq, %arg1, %c0_i32_8 : i32
    %13 = arith.extui %12 : i1 to i32
    %c0_i32_9 = arith.constant 0 : i32
    %14 = arith.cmpi ne, %13, %c0_i32_9 : i32
    scf.if %14 {
      %c0_10 = arith.constant 0 : index
      %c0_11 = arith.constant 0 : index
      %15 = vector.load %arg5[%c0_10, %c0_11] : memref<16x128xf32, #tpu.memory_space<vmem>>, vector<16x128xf32>
      %16 = vector.shape_cast %15 : vector<16x128xf32> to vector<1x16x128xf32>
      %cst_12 = arith.constant dense<0.000000e+00> : vector<1xf32>
      %17 = vector.multi_reduction <add>, %16, %cst_12 [1, 2] : vector<1x16x128xf32> to vector<1xf32>
      %18 = vector.shape_cast %17 : vector<1xf32> to vector<1x1x1xf32>
      %19 = vector.extract %18[0, 0, 0] : f32 from vector<1x1x1xf32>
      %c0_13 = arith.constant 0 : index
      %c0_14 = arith.constant 0 : index
      %20 = memref.load %arg4[%c0_13, %c0_14] : memref<1x1xf32, #tpu.memory_space<smem>>
      memref.store %19, %arg4[%c0_13, %c0_14] : memref<1x1xf32, #tpu.memory_space<smem>>
    } else {
    }
    return
  }
  func.func @transform_0(%arg0: i32, %arg1: i32) -> (i32, i32) {
    %c1_i32 = arith.constant 1 : i32
    %0 = arith.muli %arg0, %c1_i32 : i32
    %1 = arith.addi %0, %arg1 : i32
    %c0_i32 = arith.constant 0 : i32
    %c0_i32_0 = arith.constant 0 : i32
    return %1, %c0_i32 : i32, i32
  }
  func.func @transform_1(%arg0: i32, %arg1: i32) -> (i32, i32) {
    %c1_i32 = arith.constant 1 : i32
    %0 = arith.muli %arg0, %c1_i32 : i32
    %1 = arith.addi %0, %arg1 : i32
    %c0_i32 = arith.constant 0 : i32
    %c0_i32_0 = arith.constant 0 : i32
    return %1, %c0_i32 : i32, i32
  }
  func.func @transform_2(%arg0: i32, %arg1: i32) -> (i32, i32) {
    %c0_i32 = arith.constant 0 : i32
    %c0_i32_0 = arith.constant 0 : i32
    return %arg0, %c0_i32 : i32, i32
  }
}

</mosaic_0001>

<llo_original>
// kernel: mse_loss_sum.1
$region0: #{mse_loss_sum.1}
  #allocation0 [shape = 'u32[]', space=smem, size = 0x4, offset = 0x4, fixed_abs, tag = 'smem constant byte address 0x4 - core index']
  #allocation1 [shape = 'u32[144,128]{1,0:T(1,128)}', space=vmem, size = 0x12000, scoped, tag = 'internal scratch']
  #allocation2 [shape = 'f32[16,128]{1,0:T(8,128)}', space=vmem, size = 0x2000, scoped, tag = 'scratch operand']
  %s0 = inlined_call_operand.vmem [shape: f32[16,128], index: 0, kind: input, shape index: {}]
  %s1 = inlined_call_operand.vmem [shape: f32[16,128], index: 1, kind: input, shape index: {}]
  %s2 = inlined_call_operand.hbm [shape: f32[1,1], index: 2, kind: output, shape index: {}]
  %s3 = sld [smem:[#allocation0]]
  $region26: #{mse_loss_sum.1} parent=0
    _
  %s5 = ssub.s32 1, %s3
  %s6 = scalar_select 0, %s5, %s3
  $region1: #{mse_loss_sum.1} parent=0
    #allocation3 [shape = 'u8[512]{0}', space=smem, size = 0x200, scoped, tag = 'output window, operand 0, single buffered']
    #allocation4 [shape = 's32[1]{0}', space=sflag, size = 0x4, scoped, tag = 'scoped memory for mse_loss_sum.1']
    %7 = vsyncpa [#allocation4], 0
    // Predicated region
    $region2: #{mse_loss_sum.1} parent=1 // pred_check
      _
    $region3: #{mse_loss_sum.1} parent=1 // pred_check_branch
      %9 = sbr.rel (0) target = $region5
    $region4: #{mse_loss_sum.1} parent=1 // pred_region
      %s10 = sadd.s32 0, 0
      %s11 = smul.u32 2, %s10
      %p12 = scmp.lt.s32.totalorder %s11, 1
      %s13 = scalar_select %p12, %s11, 1
      %s14 = smul.addr %s13, 8
      %s15 = scalar_lea.vmem %s0, %s14
      %s16 = sadd.s32 0, 0
      %s17 = smul.u32 2, %s16
    $region5: #{mse_loss_sum.1} parent=1 // pred_fallthru
      _
    // Predicated region
    $region6: #{mse_loss_sum.1} parent=1 // pred_check
      _
    $region7: #{mse_loss_sum.1} parent=1 // pred_check_branch
      %19 = sbr.rel (0) target = $region9
    $region8: #{mse_loss_sum.1} parent=1 // pred_region
      %s20 = sadd.s32 0, 0
      %s21 = smul.u32 2, %s20
      %p22 = scmp.lt.s32.totalorder %s21, 1
      %s23 = scalar_select %p22, %s21, 1
      %s24 = smul.addr %s23, 8
      %s25 = scalar_lea.vmem %s1, %s24
      %s26 = sadd.s32 0, 0
      %s27 = smul.u32 2, %s26
    $region9: #{mse_loss_sum.1} parent=1 // pred_fallthru
      _
    %s28 = sadd.s32 0, 0
    %s29 = smul.u32 2, %s28
    %p30 = scmp.lt.s32.totalorder %s29, 1
    %s31 = scalar_select %p30, %s29, 1
    %s32 = smul.addr %s31, 8
    %s33 = scalar_lea.vmem %s0, %s32
    %s34 = sadd.s32 0, 0
    %s35 = smul.u32 2, %s34
    %p36 = scmp.lt.s32.totalorder %s35, 1
    %s37 = scalar_select %p36, %s35, 1
    %s38 = smul.addr %s37, 8
    %s39 = scalar_lea.vmem %s1, %s38
    %s40 = sadd.s32 0, 0
    %s41 = smul.u32 2, %s40
    %p42 = scmp.lt.s32.totalorder %s41, 1
    %s43 = scalar_select %p42, %s41, 1
    %s44 = smul.addr %s43, 8
    %s45 = scalar_lea.vmem %s0, %s44
    %s46 = sadd.s32 0, 0
    %s47 = smul.u32 2, %s46
    %s48 = sadd.s32 0, 0
    %s49 = smul.u32 2, %s48
    %p50 = scmp.lt.s32.totalorder %s49, 1
    %s51 = scalar_select %p50, %s49, 1
    %s52 = smul.addr %s51, 8
    %s53 = scalar_lea.vmem %s1, %s52
    %s54 = sadd.s32 0, 0
    %s55 = smul.u32 2, %s54
    %p56 = scmp.eq.s32.totalorder 0, 0
    // Predicated region
    $region10: #{mse_loss_sum.1} parent=1 // pred_check
      %p57 = pneg %p56
    $region11: #{mse_loss_sum.1} parent=1 // pred_check_branch
      %59 = sbr.rel (%p57) target = $region13
    $region12: #{mse_loss_sum.1} parent=1 // pred_region
      %60 = vst [vmem:[#allocation2] sm:$0xff] 0.0
      %61 = vst [vmem:[#allocation2 + $0x8] sm:$0xff] 0.0
    $region13: #{mse_loss_sum.1} parent=1 // pred_fallthru
      _
    %v62 = vld [vmem:[%s45] sm:$0xff]
    %v63 = vld [vmem:[%s45 + $0x8] sm:$0xff]
    %v64 = vld [vmem:[%s53] sm:$0xff]
    %v65 = vld [vmem:[%s53 + $0x8] sm:$0xff]
    %v66 = vsub.f32 %v62, %v64
    %v67 = vsub.f32 %v63, %v65
    %v68 = vmul.f32 %v66, %v66
    %v69 = vmul.f32 %v67, %v67
    %v70 = vld [vmem:[#allocation2] sm:$0xff]
    %v71 = vld [vmem:[#allocation2 + $0x8] sm:$0xff]
    %v72 = vadd.f32 %v68, 0.0
    %v73 = vadd.f32 %v69, 0.0
    %v74 = vadd.f32 %v70, %v72
    %v75 = vadd.f32 %v71, %v73
    %76 = vst [vmem:[#allocation2] sm:$0xff] %v74
    %77 = vst [vmem:[#allocation2 + $0x8] sm:$0xff] %v75
    // Predicated region
    $region14: #{mse_loss_sum.1} parent=1 // pred_check
      %p78 = pneg %p56
    $region15: #{mse_loss_sum.1} parent=1 // pred_check_branch
      %80 = sbr.rel (%p78) target = $region17
    $region16: #{mse_loss_sum.1} parent=1 // pred_region
      %v81 = vld [vmem:[#allocation2] sm:$0xff]
      %v82 = vld [vmem:[#allocation2 + $0x8] sm:$0xff]
      %v83 = vadd.f32 %v81, %v82
      %84 = vadd.xlane.f32.xlu0 %v83
      %v85 = vpop.xlane.xlu0 %84
      %v86 = vrot.slane %v85, 4
      %v87 = vadd.f32 %v85, %v86
      %v88 = vrot.slane %v87, 2
      %v89 = vadd.f32 %v87, %v88
      %v90 = vrot.slane %v89, 1
      %v91 = vadd.f32 %v89, %v90
      %s92 = vtos %v91
      %s93 = scalar_lea.smem [#allocation3], 0
      %94 = sst [smem:[%s93]] %s92
    $region17: #{mse_loss_sum.1} parent=1 // pred_fallthru
      _
    // Predicated region
    $region18: #{mse_loss_sum.1} parent=1 // pred_check
      _
    $region19: #{mse_loss_sum.1} parent=1 // pred_check_branch
      %96 = sbr.rel (0) target = $region21
    $region20: #{mse_loss_sum.1} parent=1 // pred_region
      %s98 = ssub.s32 16, 16
      %99 = vsyncadd [#allocation4], %s98
      %102 = dma.smem_to_hbm [#allocation3], 16, %s2, [#allocation4]
    $region21: #{mse_loss_sum.1} parent=1 // pred_fallthru
      _
    // Predicated region
    $region22: #{mse_loss_sum.1} parent=1 // pred_check
      _
    $region23: #{mse_loss_sum.1} parent=1 // pred_check_branch
      %104 = sbr.rel (0) target = $region25
    $region24: #{mse_loss_sum.1} parent=1 // pred_region
      %105 = dma.done [#allocation4], 16
    $region25: #{mse_loss_sum.1} parent=1 // pred_fallthru
      _
    %106 = sfence
    %107 = vsyncpa [#allocation4], 1

</llo_original>
